<compile_context>
chip_gen: v6e
topology: v6e:2x2x1
jax: 0.10.0
libtpu: 0.0.40
codegen_flags: <defaults>
</compile_context>

<pallas_src>
import jax
import jax.numpy as jnp
from jax.experimental import pallas as pl
from jax.experimental.pallas import tpu as pltpu


def _linear_kernel(x_ref, w_ref, b_ref, o_ref):
    # x_ref: (TB, K) VMEM   w_ref: (K, N) VMEM   b_ref: (1,) SMEM   o_ref: (TB, N) VMEM
    o_ref[...] = (
        jnp.dot(x_ref[...], w_ref[...], preferred_element_type=jnp.float32)
        + b_ref[0]
    ).astype(o_ref.dtype)


def _round_up(x, m):
    return ((x + m - 1) // m) * m


def _choose_tile(packed_rows, block_rows, target_steps=4, min_rows=512):
    """Batch tile: >= min_rows (256 KiB/step of 128-lane rows) to amortize the
    ~0.35 us per-grid-step overhead, <= block_rows (4 MiB/step at 8192), and
    small enough that large batches get >= target_steps grid steps (v7x
    megacore sharding + DMA/compute overlap)."""
    if packed_rows <= min_rows:
        return packed_rows                       # single full-extent block
    tb = -(-packed_rows // target_steps)         # cdiv
    tb = min(block_rows, max(min_rows, tb))
    return max(8, (tb // 8) * 8)                 # (8,128) sublane rule


def base_model_forward(x, weight, bias, *, block_rows=8192):
    """Linear layer forward pass (x @ W.T + b) as a batch-tiled Pallas kernel.

    Args:
      x:      (batch, n_features) float32
      weight: (1, n_features) float32   -- PyTorch nn.Linear weight layout
      bias:   (1,) float32
    Returns:
      (batch, 1) float32
    """
    batch, n_features = x.shape
    out_dtype = x.dtype

    # --- lane packing: fold `fold` input rows into one 128-lane row ----------
    fold = 128 // n_features if (n_features <= 128 and 128 % n_features == 0) else 1

    if fold > 1:
        padded_batch = _round_up(batch, fold)
        if padded_batch != batch:                # pad so the packed path is always taken
            x_pad = jnp.pad(x, ((0, padded_batch - batch), (0, 0)))
        else:
            x_pad = x
        packed_rows = padded_batch // fold
        k = fold * n_features                    # == 128 lanes, fully dense
        x_in = x_pad.reshape(packed_rows, k)     # contiguous view of row-major x
        # block-diagonal weight: column j holds w in rows j*F:(j+1)*F, zeros elsewhere
        w_flat = weight.reshape(n_features).astype(out_dtype)
        eye = jnp.eye(fold, dtype=out_dtype)
        w_in = (eye[:, None, :] * w_flat[None, :, None]).reshape(k, fold)
        n_out = fold
    else:
        padded_batch = batch
        packed_rows = batch
        k = n_features
        x_in = x
        w_in = weight.T.astype(out_dtype)        # (F, 1)
        n_out = 1

    b_smem = bias.reshape(1).astype(jnp.float32)  # scalar bias in SMEM

    # --- batch tile + grid ----------------------------------------------------
    tb = _choose_tile(packed_rows, block_rows)
    grid = (pl.cdiv(packed_rows, tb),)

    # Explicit scoped-VMEM budget: double-buffered x + out streams plus the
    # resident weight, with headroom. Keeps the 4 MiB tile legal on v5e's
    # 16 MiB default and well inside v7x's 64 MiB physical VMEM.
    lane = lambda n: _round_up(max(n, 1), 128)
    sub = lambda n: _round_up(max(n, 1), 8)
    vmem_need = 4 * (
        2 * sub(tb) * lane(k)          # x double buffer
        + 2 * sub(k) * lane(n_out)     # weight (tiny)
        + 2 * sub(tb) * lane(n_out)    # output double buffer (lane-padded)
    )
    vmem_limit = int(min(max(vmem_need + (8 << 20), 16 << 20), 100 << 20))

    itemsize = x.dtype.itemsize
    cost = pl.CostEstimate(
        flops=2 * padded_batch * n_features,
        transcendentals=0,
        bytes_accessed=(padded_batch * n_features + k * n_out + padded_batch) * itemsize + 4,
    )

    out_packed = pl.pallas_call(
        _linear_kernel,
        out_shape=jax.ShapeDtypeStruct((packed_rows, n_out), out_dtype),
        grid=grid,
        in_specs=[
            pl.BlockSpec((tb, k), lambda i: (i, 0)),            # streamed tiles of x
            pl.BlockSpec((k, n_out), lambda i: (0, 0)),         # weight resident in VMEM
            pl.BlockSpec(memory_space=pltpu.MemorySpace.SMEM),  # scalar bias
        ],
        out_specs=pl.BlockSpec((tb, n_out), lambda i: (i, 0)),
        compiler_params=pltpu.CompilerParams(
            dimension_semantics=("parallel",),                  # megacore on v7x
            vmem_limit_bytes=vmem_limit,
        ),
        cost_estimate=cost,
    )(x_in, w_in, b_smem)

    # Packed output [r, j] == y[fold*r + j]; row-major reshape restores order,
    # then the zero-padded rows (if any) are sliced off.
    return out_packed.reshape(padded_batch, 1)[:batch]


if __name__ == "__main__":
    key = jax.random.PRNGKey(0)
    kx, kw, kb, kx2, kx3 = jax.random.split(key, 5)

    n_features = 32
    # Deterministic parameter init mimicking nn.Linear's uniform(-1/sqrt(F), 1/sqrt(F)).
    bound = 1.0 / jnp.sqrt(jnp.float32(n_features))
    weight = jax.random.uniform(kw, (1, n_features), jnp.float32, -bound, bound)
    bias = jax.random.uniform(kb, (1,), jnp.float32, -bound, bound)

    # 1) Small batch, lane-packed path (batch % fold == 0).
    x = jax.random.normal(kx, (8, n_features), jnp.float32)
    out = base_model_forward(x, weight, bias)
    jax.block_until_ready(out)
    ref = x @ weight.T + bias
    assert out.shape == (8, 1)
    assert jnp.allclose(out, ref, atol=1e-5, rtol=1e-5)

    # 2) Batch not divisible by fold -> zero-padded, still lane-packed (no slow fallback).
    x2 = jax.random.normal(kx2, (10, n_features), jnp.float32)
    out2 = base_model_forward(x2, weight, bias)
    jax.block_until_ready(out2)
    ref2 = x2 @ weight.T + bias
    assert out2.shape == (10, 1)
    assert jnp.allclose(out2, ref2, atol=1e-5, rtol=1e-5)

    # 3) Multi-tile grid: several grid steps with a partial last tile.
    x3 = jax.random.normal(kx3, (4099, n_features), jnp.float32)
    out3 = base_model_forward(x3, weight, bias)
    jax.block_until_ready(out3)
    ref3 = x3 @ weight.T + bias
    assert out3.shape == (4099, 1)
    assert jnp.allclose(out3, ref3, atol=1e-4, rtol=1e-5)

    # 4) Unpacked fallback: n_features does not divide 128.
    nf4 = 48
    bound4 = 1.0 / jnp.sqrt(jnp.float32(nf4))
    w4 = jax.random.uniform(kw, (1, nf4), jnp.float32, -bound4, bound4)
    x4 = jax.random.normal(kx, (16, nf4), jnp.float32)
    out4 = base_model_forward(x4, w4, bias)
    jax.block_until_ready(out4)
    ref4 = x4 @ w4.T + bias
    assert out4.shape == (16, 1)
    assert jnp.allclose(out4, ref4, atol=1e-5, rtol=1e-5)

    # TODO(synk): fit/predict/summary are training-loop / bookkeeping methods with
    # no forward-pass compute to express as a kernel; only forward() is implemented.
    print("KERNEL_OK")
</pallas_src>

<mosaic_0001>
module attributes {stable_mosaic.version = 11 : i64} {
  func.func @_linear_kernel(%arg0: i32, %arg1: memref<2x128xf32, #tpu.memory_space<vmem>>, %arg2: memref<128x4xf32, #tpu.memory_space<vmem>>, %arg3: memref<1xf32, #tpu.memory_space<smem>>, %arg4: memref<2x4xf32, #tpu.memory_space<vmem>>) attributes {dimension_semantics = [#tpu.dimension_semantics<parallel>], iteration_bounds = array<i64: 1>, scalar_prefetch = 0 : i64, scratch_operands = 0 : i64, tpu.core_type = #tpu.core_type<tc>, window_params = [{transform_indices = @transform_0, window_bounds = array<i64: 2, 128>}, {pipeline_mode = #tpu.pipeline_mode<synchronous>, transform_indices = @transform_1, window_bounds = array<i64: 128, 4>}, {transform_indices = @transform_2, window_bounds = array<i64: 1>}, {transform_indices = @transform_3, window_bounds = array<i64: 2, 4>}]} {
    %c0 = arith.constant 0 : index
    %c0_0 = arith.constant 0 : index
    %0 = vector.load %arg1[%c0, %c0_0] : memref<2x128xf32, #tpu.memory_space<vmem>>, vector<2x128xf32>
    %c0_1 = arith.constant 0 : index
    %c0_2 = arith.constant 0 : index
    %1 = vector.load %arg2[%c0_1, %c0_2] : memref<128x4xf32, #tpu.memory_space<vmem>>, vector<128x4xf32>
    %cst = arith.constant dense<0.000000e+00> : vector<2x4xf32>
    %2 = tpu.matmul %0, %1, %cst {dimension_numbers = #tpu.dot_dimension_numbers<[1], [0], [0], [1], [0, 0, 1, 1], [], []>} : vector<2x128xf32>, vector<128x4xf32>, vector<2x4xf32> -> vector<2x4xf32>
    %c0_3 = arith.constant 0 : index
    %3 = memref.load %arg3[%c0_3] : memref<1xf32, #tpu.memory_space<smem>>
    %4 = vector.broadcast %3 : f32 to vector<2x4xf32>
    %5 = arith.addf %2, %4 : vector<2x4xf32>
    %c0_4 = arith.constant 0 : index
    %c0_5 = arith.constant 0 : index
    %6 = vector.load %arg4[%c0_4, %c0_5] : memref<2x4xf32, #tpu.memory_space<vmem>>, vector<2x4xf32>
    tpu.vector_store %arg4[%c0_4, %c0_5], %5 {strides = array<i32>} : memref<2x4xf32, #tpu.memory_space<vmem>>, vector<2x4xf32>,
    return
  }
  func.func @transform_0(%arg0: i32) -> (i32, i32) {
    %c0_i32 = arith.constant 0 : i32
    %c0_i32_0 = arith.constant 0 : i32
    return %arg0, %c0_i32 : i32, i32
  }
  func.func @transform_1(%arg0: i32) -> (i32, i32) {
    %c0_i32 = arith.constant 0 : i32
    %c0_i32_0 = arith.constant 0 : i32
    %c0_i32_1 = arith.constant 0 : i32
    return %c0_i32, %c0_i32_0 : i32, i32
  }
  func.func @transform_2(%arg0: i32) -> i32 {
    %c0_i32 = arith.constant 0 : i32
    %c0_i32_0 = arith.constant 0 : i32
    return %c0_i32 : i32
  }
  func.func @transform_3(%arg0: i32) -> (i32, i32) {
    %c0_i32 = arith.constant 0 : i32
    %c0_i32_0 = arith.constant 0 : i32
    return %arg0, %c0_i32 : i32, i32
  }
}

</mosaic_0001>

<llo_original>
// kernel: tpu_custom_call.1
$region0: #{tpu_custom_call.1}
  #allocation0 [shape = 'u32[]', space=smem, size = 0x4, offset = 0x4, fixed_abs, tag = 'smem constant byte address 0x4 - core index']
  #allocation1 [shape = 'u32[144,128]{1,0:T(1,128)}', space=vmem, size = 0x12000, scoped, tag = 'internal scratch']
  #allocation2 [shape = 'f32[1]{0:T(128)S(6)}', space=smem, size = 0x200, scoped, tag = 'scoped memory for tpu_custom_call.1']
  %s0 = inlined_call_operand.vmem [shape: f32[2,128], index: 0, kind: input, shape index: {}]
  %s1 = inlined_call_operand.vmem [shape: f32[128,4], index: 1, kind: input, shape index: {}]
  %s2 = inlined_call_operand.<no memory space> [shape: f32[1], index: 2, kind: input, shape index: {}]
  %s3 = inlined_call_operand.hbm [shape: f32[2,4], index: 3, kind: output, shape index: {}]
  %s4 = sld [smem:[#allocation0]]
  $region22: #{tpu_custom_call.1} parent=0
    _
  %s6 = ssub.s32 1, %s4
  %s7 = scalar_select 0, %s6, %s4
  %8 = sst [smem:[#allocation2]] %s2
  $region1: #{tpu_custom_call.1} parent=0
    #allocation3 [shape = 'u8[1024]{0}', space=vmem, size = 0x400, scoped, tag = 'output window, operand 0, single buffered']
    #allocation4 [shape = 's32[1]{0}', space=sflag, size = 0x4, scoped, tag = 'scoped memory for tpu_custom_call.1']
    %9 = vsyncpa [#allocation4], 0
    // Predicated region
    $region2: #{tpu_custom_call.1} parent=1 // pred_check
      _
    $region3: #{tpu_custom_call.1} parent=1 // pred_check_branch
      %11 = sbr.rel (0) target = $region5
    $region4: #{tpu_custom_call.1} parent=1 // pred_region
      _
    $region5: #{tpu_custom_call.1} parent=1 // pred_fallthru
      _
    // Predicated region
    $region6: #{tpu_custom_call.1} parent=1 // pred_check
      _
    $region7: #{tpu_custom_call.1} parent=1 // pred_check_branch
      %13 = sbr.rel (0) target = $region9
    $region8: #{tpu_custom_call.1} parent=1 // pred_region
      _
    $region9: #{tpu_custom_call.1} parent=1 // pred_fallthru
      _
    // Predicated region
    $region10: #{tpu_custom_call.1} parent=1 // pred_check
      _
    $region11: #{tpu_custom_call.1} parent=1 // pred_check_branch
      %15 = sbr.rel (0) target = $region13
    $region12: #{tpu_custom_call.1} parent=1 // pred_region
      _
    $region13: #{tpu_custom_call.1} parent=1 // pred_fallthru
      _
    %v16 = vld [vmem:[%s0] sm:$0x3]
    %v17 = vld [vmem:[%s1] sm:$0xff]
    %v18 = vld [vmem:[%s1 + $0x8] sm:$0xff]
    %v19 = vld [vmem:[%s1 + $0x10] sm:$0xff]
    %v20 = vld [vmem:[%s1 + $0x18] sm:$0xff]
    %v21 = vld [vmem:[%s1 + $0x20] sm:$0xff]
    %v22 = vld [vmem:[%s1 + $0x28] sm:$0xff]
    %v23 = vld [vmem:[%s1 + $0x30] sm:$0xff]
    %v24 = vld [vmem:[%s1 + $0x38] sm:$0xff]
    %v25 = vld [vmem:[%s1 + $0x40] sm:$0xff]
    %v26 = vld [vmem:[%s1 + $0x48] sm:$0xff]
    %v27 = vld [vmem:[%s1 + $0x50] sm:$0xff]
    %v28 = vld [vmem:[%s1 + $0x58] sm:$0xff]
    %v29 = vld [vmem:[%s1 + $0x60] sm:$0xff]
    %v30 = vld [vmem:[%s1 + $0x68] sm:$0xff]
    %v31 = vld [vmem:[%s1 + $0x70] sm:$0xff]
    %v32 = vld [vmem:[%s1 + $0x78] sm:$0xff]
    %s33 = sld [smem:[#allocation2]]
    %v34 = vstv %s33
    %35 = vmatprep.subr.mxu0 0.0
    %36 = vmatpush1.msra.mxu0 %v32
    %37 = vmatprep.subr.mxu0 0.0
    %38 = vmatpush1.msra.mxu0 %v31
    %39 = vmatprep.subr.mxu0 0.0
    %40 = vmatpush1.msra.mxu0 %v30
    %41 = vmatprep.subr.mxu0 0.0
    %42 = vmatpush1.msra.mxu0 %v29
    %43 = vmatprep.subr.mxu0 0.0
    %44 = vmatpush1.msra.mxu0 %v28
    %45 = vmatprep.subr.mxu0 0.0
    %46 = vmatpush1.msra.mxu0 %v27
    %47 = vmatprep.subr.mxu0 0.0
    %48 = vmatpush1.msra.mxu0 %v26
    %49 = vmatprep.subr.mxu0 0.0
    %50 = vmatpush1.msra.mxu0 %v25
    %51 = vmatprep.subr.mxu0 0.0
    %52 = vmatpush1.msra.mxu0 %v24
    %53 = vmatprep.subr.mxu0 0.0
    %54 = vmatpush1.msra.mxu0 %v23
    %55 = vmatprep.subr.mxu0 0.0
    %56 = vmatpush1.msra.mxu0 %v22
    %57 = vmatprep.subr.mxu0 0.0
    %58 = vmatpush1.msra.mxu0 %v21
    %59 = vmatprep.subr.mxu0 0.0
    %60 = vmatpush1.msra.mxu0 %v20
    %61 = vmatprep.subr.mxu0 0.0
    %62 = vmatpush1.msra.mxu0 %v19
    %63 = vmatprep.subr.mxu0 0.0
    %64 = vmatpush1.msra.mxu0 %v18
    %65 = vmatprep.subr.mxu0 0.0
    %66 = vmatpush1.msra.mxu0 %v17
    %67 = vmatprep.subr.mxu0 0.0
    %68 = vmatpush2.msra.mxu0 0.0
    %69 = vmatprep.subr.mxu0 0.0
    %70 = vmatpush2.msra.mxu0 0.0
    %71 = vmatprep.subr.mxu0 0.0
    %72 = vmatpush2.msra.mxu0 0.0
    %73 = vmatprep.subr.mxu0 0.0
    %74 = vmatpush2.msra.mxu0 0.0
    %75 = vmatprep.subr.mxu0 0.0
    %76 = vmatpush2.msra.mxu0 0.0
    %77 = vmatprep.subr.mxu0 0.0
    %78 = vmatpush2.msra.mxu0 0.0
    %79 = vmatprep.subr.mxu0 0.0
    %80 = vmatpush2.msra.mxu0 0.0
    %81 = vmatprep.subr.mxu0 0.0
    %82 = vmatpush2.msra.mxu0 0.0
    %83 = vmatprep.subr.mxu0 0.0
    %84 = vmatpush2.msra.mxu0 0.0
    %85 = vmatprep.subr.mxu0 0.0
    %86 = vmatpush2.msra.mxu0 0.0
    %87 = vmatprep.subr.mxu0 0.0
    %88 = vmatpush2.msra.mxu0 0.0
    %89 = vmatprep.subr.mxu0 0.0
    %90 = vmatpush2.msra.mxu0 0.0
    %91 = vmatprep.subr.mxu0 0.0
    %92 = vmatpush2.msra.mxu0 0.0
    %93 = vmatprep.subr.mxu0 0.0
    %94 = vmatpush2.msra.mxu0 0.0
    %95 = vmatprep.subr.mxu0 0.0
    %96 = vmatpush2.msra.mxu0 0.0
    %97 = vmatprep.subr.mxu0 0.0
    %98 = vmatpush2.msra.mxu0 0.0
    %99 = vmatprep.mubr.f32.mxu0 0.0
    %100 = vmatmul.mubr.f32.gmra.mxu0 %v16
    %v101 = vpop.f32.mrf.mxu0
    %v102 = vadd.f32 %v34, %v101
    %v103 = vpop.f32.mrf.mxu0
    %104 = vdwg.mxu0
    %vm105 = vcmask 25600
    %106 = vst.msk [vmem:[#allocation3] sm:$0x3] %vm105, %v102
    // Predicated region
    $region14: #{tpu_custom_call.1} parent=1 // pred_check
      _
    $region15: #{tpu_custom_call.1} parent=1 // pred_check_branch
      %108 = sbr.rel (0) target = $region17
    $region16: #{tpu_custom_call.1} parent=1 // pred_region
      %s110 = ssub.s32 32, 32
      %111 = vsyncadd [#allocation4], %s110
      %s113 = sshll.u32 [#allocation3], 4
      %s114 = int_to_ptr.vmem [resolvable:$true] %s113
      %116 = dma.vmem_to_hbm [thread:$0]  %s114, 32, %s3, [#allocation4]
    $region17: #{tpu_custom_call.1} parent=1 // pred_fallthru
      _
    // Predicated region
    $region18: #{tpu_custom_call.1} parent=1 // pred_check
      _
    $region19: #{tpu_custom_call.1} parent=1 // pred_check_branch
      %118 = sbr.rel (0) target = $region21
    $region20: #{tpu_custom_call.1} parent=1 // pred_region
      %119 = dma.done [#allocation4], 32
    $region21: #{tpu_custom_call.1} parent=1 // pred_fallthru
      _
    %120 = vsyncpa [#allocation4], 1

</llo_original>
